<compile_context>
chip_gen: v7x
topology: tpu7x:2x2x1
jax: 0.10.0
libtpu: 0.0.40
codegen_flags: <defaults>
</compile_context>

<pallas_src>
import functools

import jax
import jax.numpy as jnp
from jax.experimental import pallas as pl
from jax.experimental.pallas import tpu as pltpu


# ---------------------------------------------------------------------------
# Kernel
# ---------------------------------------------------------------------------
def langfeat_kernel(x_ref, w_ref, gamma_ref, beta_ref, o_ref, *,
                    eps, inv_n, tk, x_resident):
    # Grid: (feature tile j, contraction tile k).  o_ref: (N, TF) f32, resident
    # across the K sweep (its index_map ignores k) -> used as the accumulator.
    k = pl.program_id(1)
    is_last = k == pl.num_programs(1) - 1

    if x_resident:
        # x block is the whole (N, ninp_p) activation matrix; slice the K window.
        if tk == x_ref.shape[1]:
            x = x_ref[...]
        else:
            start = pl.multiple_of(k * tk, 128)
            x = x_ref[:, pl.ds(start, tk)]
    else:
        x = x_ref[...]          # streamed (N, TK) block

    prod = jnp.dot(x, w_ref[...], preferred_element_type=jnp.float32)

    @pl.when(k == 0)
    def _():
        o_ref[...] = prod        # first K step writes (no separate zero-init pass)

    @pl.when(k > 0)
    def _():
        o_ref[...] += prod

    @pl.when(is_last)
    def _():
        acc = o_ref[...]
        # BatchNorm1d, training-mode batch statistics (biased variance), 1 pass.
        s = jnp.sum(acc, axis=0, keepdims=True)
        sq = jnp.sum(acc * acc, axis=0, keepdims=True)
        mean = s * inv_n
        var = jnp.maximum(sq * inv_n - mean * mean, 0.0)
        inv = jax.lax.rsqrt(var + eps)               # EUP slot -> ~free
        # Fused affine: bn = acc*scale + shift (2 full-tile VPU ops instead of 4).
        scale = inv * gamma_ref[...]
        shift = beta_ref[...] - mean * scale
        o_ref[...] = jnp.maximum(acc * scale + shift, 0.0)


# ---------------------------------------------------------------------------
# Tiling helpers
# ---------------------------------------------------------------------------
def _round_up(x, m):
    return ((x + m - 1) // m) * m


def _vmem_capacity_bytes():
    """Best-effort per-core VMEM capacity; conservative (v7x-sized) fallback."""
    try:
        info = pltpu.get_tpu_info()
        for attr in ("vmem_capacity_bytes", "vmem_size_bytes", "vmem_bytes"):
            v = getattr(info, attr, None)
            if v:
                return int(v)
    except Exception:
        pass
    return 64 * 1024 * 1024


def _tile_candidates(dim, cap):
    """Multiples of 128 dividing `dim` (itself a 128-multiple), descending, <= cap."""
    cap = max(128, min(dim, (cap // 128) * 128))
    return [t for t in range(cap, 127, -128) if dim % t == 0]


def _choose_tiles(N, ninp_p, feat_p, itemsize, budget, max_tf, max_tk,
                  x_resident, w_bufs):
    """Pick (TF, TK, x_resident) so live (double-buffered) VMEM stays under budget."""
    def live(TF, TK, resident):
        x_b = 2 * N * (ninp_p if resident else TK) * itemsize   # x buffers
        w_b = max(2, w_bufs) * TK * TF * itemsize                # streamed weights
        o_b = 2 * N * TF * 4                                     # f32 output/accumulator
        p_b = 4 * TF * 4                                         # gamma/beta
        return x_b + w_b + o_b + p_b

    tf_cands = _tile_candidates(feat_p, max_tf)
    tk_cands = _tile_candidates(ninp_p, max_tk)
    resident_opts = (True, False) if x_resident is None else (bool(x_resident),)
    for resident in resident_opts:        # prefer x resident: single HBM fetch of x
        for TF in tf_cands:               # prefer wide feature tiles (fewer steps / re-streams)
            for TK in tk_cands:
                if live(TF, TK, resident) <= budget:
                    return TF, TK, resident
    # TODO(synk): batches too large for any tile need an N-tiled two-pass BN path.
    return 128, 128, False


# ---------------------------------------------------------------------------
# Wrapper
# ---------------------------------------------------------------------------
def langfeat(x, w, b=None, gamma=None, beta=None, *, eps=1e-5,
             bf16_matmul=False, max_tf=1024, max_tk=1024,
             x_resident=None, w_bufs=2):
    N, ninp = x.shape
    ninp_w, feat_dim = w.shape
    assert ninp_w == ninp

    # Linear bias is cancelled by the batch-mean subtraction of training-mode
    # BatchNorm (y - mean(y) is invariant to a per-feature constant), so drop it:
    # one fewer DMA + one fewer full-tile add.  (Only valid for batch-stat BN.)
    del b

    if gamma is None:
        gamma = jnp.ones((feat_dim,), jnp.float32)
    if beta is None:
        beta = jnp.zeros((feat_dim,), jnp.float32)
    gamma = jnp.asarray(gamma, jnp.float32).reshape(1, feat_dim)
    beta = jnp.asarray(beta, jnp.float32).reshape(1, feat_dim)

    # bf16 MXU operands (cast in the wrapper: half the x/w DMA bytes, no in-kernel
    # VPU packs).  Accumulation stays f32 in the output block.  Note: expect
    # ~1e-2 tolerance vs an f32 reference when enabling this.
    op_dtype = jnp.bfloat16 if bf16_matmul else jnp.float32
    x = x.astype(op_dtype)
    w = w.astype(op_dtype)

    # Pad K / feature dims to multiples of 128 -> lane-aligned tiles, unmasked
    # lane-dense stores, and no degenerate "full-dim block" fallback.
    ninp_p = _round_up(ninp, 128)
    feat_p = _round_up(feat_dim, 128)
    if ninp_p != ninp:
        x = jnp.pad(x, ((0, 0), (0, ninp_p - ninp)))
        w = jnp.pad(w, ((0, ninp_p - ninp), (0, 0)))
    if feat_p != feat_dim:
        w = jnp.pad(w, ((0, 0), (0, feat_p - feat_dim)))
        gamma = jnp.pad(gamma, ((0, 0), (0, feat_p - feat_dim)), constant_values=1.0)
        beta = jnp.pad(beta, ((0, 0), (0, feat_p - feat_dim)))

    # Per-generation VMEM-budgeted tile selection (v5e/v6e ~128 MiB, v7x 64 MiB).
    vmem_cap = _vmem_capacity_bytes()
    budget = int(0.60 * vmem_cap)
    TF, TK, resident = _choose_tiles(
        N, ninp_p, feat_p, jnp.dtype(op_dtype).itemsize,
        budget, max_tf, max_tk, x_resident, w_bufs)

    grid = (feat_p // TF, ninp_p // TK)   # (feature tiles, K tiles) -> reduction last

    if resident:
        # Constant index_map -> x DMA'd from HBM exactly once, stays in VMEM.
        x_spec = pl.BlockSpec((N, ninp_p), lambda j, k: (0, 0))
    else:
        x_spec = pl.BlockSpec((N, TK), lambda j, k: (0, k))       # streamed per K step

    w_kwargs = {}
    if w_bufs != 2:
        w_kwargs["pipeline_mode"] = pl.Buffered(w_bufs)           # hide w DMA for small N
    w_spec = pl.BlockSpec((TK, TF), lambda j, k: (k, j), **w_kwargs)

    kernel = functools.partial(langfeat_kernel, eps=float(eps), inv_n=1.0 / N,
                               tk=TK, x_resident=resident)

    out = pl.pallas_call(
        kernel,
        out_shape=jax.ShapeDtypeStruct((N, feat_p), jnp.float32),
        grid_spec=pltpu.PrefetchScalarGridSpec(
            num_scalar_prefetch=0,
            grid=grid,
            in_specs=[
                x_spec,
                w_spec,
                pl.BlockSpec((1, TF), lambda j, k: (0, j)),   # gamma, feature-tiled
                pl.BlockSpec((1, TF), lambda j, k: (0, j)),   # beta, feature-tiled
            ],
            # Output block index ignores k -> VMEM-resident f32 accumulator
            # across the whole K sweep (no separate scratch buffer).
            out_specs=pl.BlockSpec((N, TF), lambda j, k: (0, j)),
        ),
        compiler_params=pltpu.CompilerParams(
            # Feature tiles independent (per-feature BN stats) -> parallel (megacore);
            # K is a reduction into the resident output block -> arbitrary.
            dimension_semantics=("parallel", "arbitrary"),
            vmem_limit_bytes=min(int(0.85 * vmem_cap), 110 * 1024 * 1024),
        ),
    )(x, w, gamma, beta)

    return out if feat_p == feat_dim else out[:, :feat_dim]


# ---------------------------------------------------------------------------
# Reference + test
# ---------------------------------------------------------------------------
def reference(x, w, b, gamma, beta, eps=1e-5):
    y = x @ w + b
    mean = jnp.mean(y, axis=0, keepdims=True)
    var = jnp.mean((y - mean) ** 2, axis=0, keepdims=True)
    bn = (y - mean) / jnp.sqrt(var + eps) * gamma + beta
    return jnp.maximum(bn, 0.0)


def _make_inputs(key, N, ninp, feat_dim):
    kx, kw, kb, kg, kbt = jax.random.split(key, 5)
    bound = 1.0 / (ninp ** 0.5)          # nn.Linear-style uniform init
    x = jax.random.normal(kx, (N, ninp), jnp.float32)
    w = jax.random.uniform(kw, (ninp, feat_dim), jnp.float32, -bound, bound)
    b = jax.random.uniform(kb, (1, feat_dim), jnp.float32, -bound, bound)
    gamma = 1.0 + 0.1 * jax.random.normal(kg, (1, feat_dim), jnp.float32)
    beta = 0.1 * jax.random.normal(kbt, (1, feat_dim), jnp.float32)
    return x, w, b, gamma, beta


if __name__ == "__main__":
    key = jax.random.PRNGKey(0)
    k1, k2 = jax.random.split(key)

    # Case 1: resident-x path; max_tf=128 forces 2 feature tiles so the tiled
    # pipeline (parallel feature axis + accumulator epilogue) is exercised.
    x, w, b, gamma, beta = _make_inputs(k1, 16, 64, 256)
    out = jax.block_until_ready(langfeat(x, w, b, gamma, beta, max_tf=128))
    ref = reference(x, w, b, gamma, beta)
    assert out.shape == ref.shape
    assert jnp.allclose(out, ref, atol=1e-4, rtol=1e-4), \
        float(jnp.max(jnp.abs(out - ref)))

    # Case 2: streamed-x path with a multi-step K reduction and non-128-multiple
    # dims (exercises the zero-padding + output slicing and masked-free stores).
    x, w, b, gamma, beta = _make_inputs(k2, 12, 300, 200)
    out = jax.block_until_ready(
        langfeat(x, w, b, gamma, beta, max_tf=128, max_tk=128, x_resident=False))
    ref = reference(x, w, b, gamma, beta)
    assert out.shape == ref.shape
    assert jnp.allclose(out, ref, atol=1e-4, rtol=1e-4), \
        float(jnp.max(jnp.abs(out - ref)))

    print("KERNEL_OK")
</pallas_src>

<mosaic_0001>
module attributes {stable_mosaic.version = 11 : i64} {
  func.func @langfeat_kernel(%arg0: i32, %arg1: i32, %arg2: memref<16x128xf32, #tpu.memory_space<vmem>>, %arg3: memref<128x128xf32, #tpu.memory_space<vmem>>, %arg4: memref<1x128xf32, #tpu.memory_space<vmem>>, %arg5: memref<1x128xf32, #tpu.memory_space<vmem>>, %arg6: memref<16x128xf32, #tpu.memory_space<vmem>>) attributes {dimension_semantics = [#tpu.dimension_semantics<parallel>, #tpu.dimension_semantics<arbitrary>], iteration_bounds = array<i64: 2, 1>, scalar_prefetch = 0 : i64, scratch_operands = 0 : i64, tpu.core_type = #tpu.core_type<tc>, window_params = [{pipeline_mode = #tpu.pipeline_mode<synchronous>, transform_indices = @transform_0, window_bounds = array<i64: 16, 128>}, {transform_indices = @transform_1, window_bounds = array<i64: 128, 128>}, {transform_indices = @transform_2, window_bounds = array<i64: 1, 128>}, {transform_indices = @transform_3, window_bounds = array<i64: 1, 128>}, {transform_indices = @transform_4, window_bounds = array<i64: 16, 128>}]} {
    %c0_i32 = arith.constant 0 : i32
    %0 = arith.cmpi eq, %arg1, %c0_i32 : i32
    %c0 = arith.constant 0 : index
    %c0_0 = arith.constant 0 : index
    %1 = vector.load %arg2[%c0, %c0_0] : memref<16x128xf32, #tpu.memory_space<vmem>>, vector<16x128xf32>
    %c0_1 = arith.constant 0 : index
    %c0_2 = arith.constant 0 : index
    %2 = vector.load %arg3[%c0_1, %c0_2] : memref<128x128xf32, #tpu.memory_space<vmem>>, vector<128x128xf32>
    %cst = arith.constant dense<0.000000e+00> : vector<16x128xf32>
    %3 = tpu.matmul %1, %2, %cst {dimension_numbers = #tpu.dot_dimension_numbers<[1], [0], [0], [1], [0, 0, 1, 1], [], []>} : vector<16x128xf32>, vector<128x128xf32>, vector<16x128xf32> -> vector<16x128xf32>
    %c0_i32_3 = arith.constant 0 : i32
    %4 = arith.cmpi eq, %arg1, %c0_i32_3 : i32
    %5 = arith.extui %4 : i1 to i32
    %c0_i32_4 = arith.constant 0 : i32
    %6 = arith.cmpi ne, %5, %c0_i32_4 : i32
    scf.if %6 {
      %c0_8 = arith.constant 0 : index
      %c0_9 = arith.constant 0 : index
      %12 = vector.load %arg6[%c0_8, %c0_9] : memref<16x128xf32, #tpu.memory_space<vmem>>, vector<16x128xf32>
      tpu.vector_store %arg6[%c0_8, %c0_9], %3 {strides = array<i32>} : memref<16x128xf32, #tpu.memory_space<vmem>>, vector<16x128xf32>,
    } else {
    }
    %c0_i32_5 = arith.constant 0 : i32
    %7 = arith.cmpi sgt, %arg1, %c0_i32_5 : i32
    %8 = arith.extui %7 : i1 to i32
    %c0_i32_6 = arith.constant 0 : i32
    %9 = arith.cmpi ne, %8, %c0_i32_6 : i32
    scf.if %9 {
      %c0_8 = arith.constant 0 : index
      %c0_9 = arith.constant 0 : index
      %12 = vector.load %arg6[%c0_8, %c0_9] : memref<16x128xf32, #tpu.memory_space<vmem>>, vector<16x128xf32>
      %13 = arith.addf %12, %3 : vector<16x128xf32>
      %c0_10 = arith.constant 0 : index
      %c0_11 = arith.constant 0 : index
      %14 = vector.load %arg6[%c0_10, %c0_11] : memref<16x128xf32, #tpu.memory_space<vmem>>, vector<16x128xf32>
      tpu.vector_store %arg6[%c0_10, %c0_11], %13 {strides = array<i32>} : memref<16x128xf32, #tpu.memory_space<vmem>>, vector<16x128xf32>,
    } else {
    }
    %10 = arith.extui %0 : i1 to i32
    %c0_i32_7 = arith.constant 0 : i32
    %11 = arith.cmpi ne, %10, %c0_i32_7 : i32
    scf.if %11 {
      %c0_8 = arith.constant 0 : index
      %c0_9 = arith.constant 0 : index
      %12 = vector.load %arg6[%c0_8, %c0_9] : memref<16x128xf32, #tpu.memory_space<vmem>>, vector<16x128xf32>
      %cst_10 = arith.constant dense<0.000000e+00> : vector<128xf32>
      %13 = vector.multi_reduction <add>, %12, %cst_10 [0] : vector<16x128xf32> to vector<128xf32>
      %14 = vector.shape_cast %13 : vector<128xf32> to vector<1x128xf32>
      %15 = arith.mulf %12, %12 : vector<16x128xf32>
      %cst_11 = arith.constant dense<0.000000e+00> : vector<128xf32>
      %16 = vector.multi_reduction <add>, %15, %cst_11 [0] : vector<16x128xf32> to vector<128xf32>
      %17 = vector.shape_cast %16 : vector<128xf32> to vector<1x128xf32>
      %cst_12 = arith.constant 6.250000e-02 : f32
      %18 = vector.broadcast %cst_12 : f32 to vector<1x128xf32>
      %19 = arith.mulf %14, %18 : vector<1x128xf32>
      %cst_13 = arith.constant 6.250000e-02 : f32
      %20 = vector.broadcast %cst_13 : f32 to vector<1x128xf32>
      %21 = arith.mulf %17, %20 : vector<1x128xf32>
      %22 = arith.mulf %19, %19 : vector<1x128xf32>
      %23 = arith.subf %21, %22 : vector<1x128xf32>
      %cst_14 = arith.constant 0.000000e+00 : f32
      %24 = vector.broadcast %cst_14 : f32 to vector<1x128xf32>
      %25 = arith.maximumf %23, %24 : vector<1x128xf32>
      %cst_15 = arith.constant 9.99999974E-6 : f32
      %26 = vector.broadcast %cst_15 : f32 to vector<1x128xf32>
      %27 = arith.addf %25, %26 : vector<1x128xf32>
      %28 = math.rsqrt %27 : vector<1x128xf32>
      %c0_16 = arith.constant 0 : index
      %c0_17 = arith.constant 0 : index
      %29 = vector.load %arg4[%c0_16, %c0_17] : memref<1x128xf32, #tpu.memory_space<vmem>>, vector<1x128xf32>
      %30 = arith.mulf %28, %29 : vector<1x128xf32>
      %c0_18 = arith.constant 0 : index
      %c0_19 = arith.constant 0 : index
      %31 = vector.load %arg5[%c0_18, %c0_19] : memref<1x128xf32, #tpu.memory_space<vmem>>, vector<1x128xf32>
      %32 = arith.mulf %19, %30 : vector<1x128xf32>
      %33 = arith.subf %31, %32 : vector<1x128xf32>
      %34 = vector.broadcast %30 : vector<1x128xf32> to vector<16x128xf32>
      %35 = arith.mulf %12, %34 : vector<16x128xf32>
      %36 = vector.broadcast %33 : vector<1x128xf32> to vector<16x128xf32>
      %37 = arith.addf %35, %36 : vector<16x128xf32>
      %cst_20 = arith.constant 0.000000e+00 : f32
      %38 = vector.broadcast %cst_20 : f32 to vector<16x128xf32>
      %39 = arith.maximumf %37, %38 : vector<16x128xf32>
      %c0_21 = arith.constant 0 : index
      %c0_22 = arith.constant 0 : index
      %40 = vector.load %arg6[%c0_21, %c0_22] : memref<16x128xf32, #tpu.memory_space<vmem>>, vector<16x128xf32>
      tpu.vector_store %arg6[%c0_21, %c0_22], %39 {strides = array<i32>} : memref<16x128xf32, #tpu.memory_space<vmem>>, vector<16x128xf32>,
    } else {
    }
    return
  }
  func.func @transform_0(%arg0: i32, %arg1: i32) -> (i32, i32) {
    %c0_i32 = arith.constant 0 : i32
    %c0_i32_0 = arith.constant 0 : i32
    %c0_i32_1 = arith.constant 0 : i32
    return %c0_i32, %c0_i32_0 : i32, i32
  }
  func.func @transform_1(%arg0: i32, %arg1: i32) -> (i32, i32) {
    %c0_i32 = arith.constant 0 : i32
    return %arg1, %arg0 : i32, i32
  }
  func.func @transform_2(%arg0: i32, %arg1: i32) -> (i32, i32) {
    %c0_i32 = arith.constant 0 : i32
    %c0_i32_0 = arith.constant 0 : i32
    return %c0_i32, %arg0 : i32, i32
  }
  func.func @transform_3(%arg0: i32, %arg1: i32) -> (i32, i32) {
    %c0_i32 = arith.constant 0 : i32
    %c0_i32_0 = arith.constant 0 : i32
    return %c0_i32, %arg0 : i32, i32
  }
  func.func @transform_4(%arg0: i32, %arg1: i32) -> (i32, i32) {
    %c0_i32 = arith.constant 0 : i32
    %c0_i32_0 = arith.constant 0 : i32
    return %c0_i32, %arg0 : i32, i32
  }
}

</mosaic_0001>

<llo_original>
// kernel: tpu_custom_call.1
$region0: #{tpu_custom_call.1}
  #allocation0 [shape = 'u32[]', space=smem, size = 0x4, offset = 0x4, fixed_abs, tag = 'smem constant byte address 0x4 - core index']
  #allocation1 [shape = 'u32[144,128]{1,0:T(1,128)}', space=vmem, size = 0x12000, scoped, tag = 'internal scratch']
  %s0 = inlined_call_operand.hbm [shape: f32[16,128], index: 0, kind: input, shape index: {}]
  %s1 = inlined_call_operand.hbm [shape: f32[128,256], index: 1, kind: input, shape index: {}]
  %s2 = inlined_call_operand.vmem [shape: f32[1,256], index: 2, kind: input, shape index: {}]
  %s3 = inlined_call_operand.vmem [shape: f32[1,256], index: 3, kind: input, shape index: {}]
  %s4 = inlined_call_operand.hbm [shape: f32[16,256], index: 4, kind: output, shape index: {}]
  %s5 = sld [smem:[#allocation0]]
  $region69: #{tpu_custom_call.1} parent=0
    _
  %s7 = ssub.s32 1, %s5
  %s8 = scalar_select 0, %s7, %s5
  $region1: #{tpu_custom_call.1} parent=0
    #allocation2 [shape = 'u8[8192]{0}', space=vmem, size = 0x2000, scoped, tag = 'input window, operand 0, single buffered']
    #allocation3 [shape = 's32[2]{0}', space=sflag, size = 0x8, scoped, tag = 'scoped memory for tpu_custom_call.1']
    #allocation4 [shape = 's32[2]{0}', space=sflag, size = 0x8, scoped, tag = 'scoped memory for tpu_custom_call.1']
    #allocation5 [shape = 'u8[131072]{0}', space=vmem, size = 0x20000, scoped, tag = 'input window, operand 1']
    #allocation6 [shape = 's32[2]{0}', space=sflag, size = 0x8, scoped, tag = 'scoped memory for tpu_custom_call.1']
    #allocation7 [shape = 'u8[16384]{0}', space=vmem, size = 0x4000, scoped, tag = 'output window, operand 0']
    %9 = vsyncpa [#allocation3], 0
    %10 = vsyncpa [#allocation6], 0
    %s11 = scalar_lea.sflag [#allocation6], 1
    %12 = vsyncpa %s11, 0
    %13 = vsyncpa [#allocation4], 0
    %s14 = scalar_lea.sflag [#allocation4], 1
    %15 = vsyncpa %s14, 0
    loop: start=0, step=1, limit=4
    $region2: #{tpu_custom_call.1} parent=1 // loop_pre_header
      _
    $region3: #{tpu_custom_call.1} parent=1 // loop_header
      %s17 = sphi 0, %s21
      %p18 = scmp.ge.s32.totalorder %s17, 4
      %s24 = sphi 0, %s36
      %s25 = sphi 0, %s32
      %s26 = sphi 0, %s24
      %s27 = sphi 0, %s25
      %s28 = sphi 0, %s26
      %s29 = sphi 0, %s27
      %s37 = sphi 0, %s37
      %s39 = sphi 0, %s37
      %s40 = sphi 0, %s39
      %s54 = sphi 0, %s40
      %s62 = sphi 0, %s64
      %s65 = sphi 0, %s62
      %s66 = sphi 0, %s65
      %s82 = sphi 0, %s66
      %s88 = sphi 0, %s90
      %s91 = sphi 0, %s88
      %s92 = sphi 0, %s91
      %s108 = sphi 0, %s92
      %s114 = sphi 0, %s116
      %s117 = sphi 0, %s114
      %s118 = sphi 0, %s117
      %s134 = sphi 0, %s118
      %s140 = sphi 0, %s142
      %s143 = sphi 0, %s140
      %s144 = sphi 0, %s143
      %s160 = sphi 0, %s144
    $region4: #{tpu_custom_call.1} parent=1 // loop_header_branch
      %20 = sbr.rel (%p18) target = $region8
    $region5: #{tpu_custom_call.1} parent=1 // loop_body
      %s22 = ssub.s32 %s17, 1
      %s23 = ssub.s32 %s17, 2
      %s30 = sadd.s32 1, %s25
      %p31 = scmp.ge.s32.totalorder %s30, 1
      %s32 = scalar_select %p31, 0, %s30
      %s33 = sadd.s32 1, %s24
      %s34 = scalar_select %p31, %s33, %s24
      %p35 = scmp.ge.s32.totalorder %s34, 2
      %s36 = scalar_select %p35, 0, %s34
      %s38 = sadd.s32 %s37, 1
      %p41 = scmp.eq.s32.totalorder %s17, 1
      %p42 = scmp.ne.s32.totalorder %s37, %s39
      %p43 = scmp.eq.s32.totalorder %s17, 0
      %p44 = por %p42, %p43
      %p45 = scmp.ne.s32.totalorder %s37, %s39
      %p46 = scmp.eq.s32.totalorder %s22, 1
      %p47 = por %p45, %p46
      %p48 = scmp.ne.s32.totalorder %s39, %s40
      %p49 = scmp.eq.s32.totalorder %s22, 0
      %p50 = por %p48, %p49
      %p51 = scmp.ne.s32.totalorder %s39, %s40
      %p52 = scmp.eq.s32.totalorder %s23, 1
      %p53 = por %p51, %p52
      %p55 = scmp.ne.s32.totalorder %s40, %s54
      %p56 = scmp.eq.s32.totalorder %s23, 0
      %p57 = por %p55, %p56
      %s58 = ssub.s32 %s25, %s32
      %s59 = ssub.s32 %s24, %s36
      %s60 = sor.u32 %s58, %s59
      %p61 = scmp.eq.s32.totalorder %s60, 0
      %s63 = sadd.s32 %s62, 1
      %s64 = scalar_select %p61, %s62, %s63
      %p67 = pneg %p61
      %p68 = scmp.eq.s32.totalorder %s17, 1
      %p69 = por %p67, %p68
      %p70 = scmp.ne.s32.totalorder %s62, %s65
      %p71 = scmp.eq.s32.totalorder %s17, 0
      %p72 = por %p70, %p71
      %p73 = scmp.ne.s32.totalorder %s62, %s65
      %p74 = scmp.eq.s32.totalorder %s22, 1
      %p75 = por %p73, %p74
      %p76 = scmp.ne.s32.totalorder %s65, %s66
      %p77 = scmp.eq.s32.totalorder %s22, 0
      %p78 = por %p76, %p77
      %p79 = scmp.ne.s32.totalorder %s65, %s66
      %p80 = scmp.eq.s32.totalorder %s23, 1
      %p81 = por %p79, %p80
      %p83 = scmp.ne.s32.totalorder %s66, %s82
      %p84 = scmp.eq.s32.totalorder %s23, 0
      %p85 = por %p83, %p84
      %s86 = ssub.s32 %s24, %s36
      %p87 = scmp.eq.s32.totalorder %s86, 0
      %s89 = sadd.s32 %s88, 1
      %s90 = scalar_select %p87, %s88, %s89
      %p93 = pneg %p87
      %p94 = scmp.eq.s32.totalorder %s17, 1
      %p95 = por %p93, %p94
      %p96 = scmp.ne.s32.totalorder %s88, %s91
      %p97 = scmp.eq.s32.totalorder %s17, 0
      %p98 = por %p96, %p97
      %p99 = scmp.ne.s32.totalorder %s88, %s91
      %p100 = scmp.eq.s32.totalorder %s22, 1
      %p101 = por %p99, %p100
      %p102 = scmp.ne.s32.totalorder %s91, %s92
      %p103 = scmp.eq.s32.totalorder %s22, 0
      %p104 = por %p102, %p103
      %p105 = scmp.ne.s32.totalorder %s91, %s92
      %p106 = scmp.eq.s32.totalorder %s23, 1
      %p107 = por %p105, %p106
      %p109 = scmp.ne.s32.totalorder %s92, %s108
      %p110 = scmp.eq.s32.totalorder %s23, 0
      %p111 = por %p109, %p110
      %s112 = ssub.s32 %s24, %s36
      %p113 = scmp.eq.s32.totalorder %s112, 0
      %s115 = sadd.s32 %s114, 1
      %s116 = scalar_select %p113, %s114, %s115
      %p119 = pneg %p113
      %p120 = scmp.eq.s32.totalorder %s17, 1
      %p121 = por %p119, %p120
      %p122 = scmp.ne.s32.totalorder %s114, %s117
      %p123 = scmp.eq.s32.totalorder %s17, 0
      %p124 = por %p122, %p123
      %p125 = scmp.ne.s32.totalorder %s114, %s117
      %p126 = scmp.eq.s32.totalorder %s22, 1
      %p127 = por %p125, %p126
      %p128 = scmp.ne.s32.totalorder %s117, %s118
      %p129 = scmp.eq.s32.totalorder %s22, 0
      %p130 = por %p128, %p129
      %p131 = scmp.ne.s32.totalorder %s117, %s118
      %p132 = scmp.eq.s32.totalorder %s23, 1
      %p133 = por %p131, %p132
      %p135 = scmp.ne.s32.totalorder %s118, %s134
      %p136 = scmp.eq.s32.totalorder %s23, 0
      %p137 = por %p135, %p136
      %s138 = ssub.s32 %s24, %s36
      %p139 = scmp.eq.s32.totalorder %s138, 0
      %s141 = sadd.s32 %s140, 1
      %s142 = scalar_select %p139, %s140, %s141
      %p145 = pneg %p139
      %p146 = scmp.eq.s32.totalorder %s17, 1
      %p147 = por %p145, %p146
      %p148 = scmp.ne.s32.totalorder %s140, %s143
      %p149 = scmp.eq.s32.totalorder %s17, 0
      %p150 = por %p148, %p149
      %p151 = scmp.ne.s32.totalorder %s140, %s143
      %p152 = scmp.eq.s32.totalorder %s22, 1
      %p153 = por %p151, %p152
      %p154 = scmp.ne.s32.totalorder %s143, %s144
      %p155 = scmp.eq.s32.totalorder %s22, 0
      %p156 = por %p154, %p155
      %p157 = scmp.ne.s32.totalorder %s143, %s144
      %p158 = scmp.eq.s32.totalorder %s23, 1
      %p159 = por %p157, %p158
      %p161 = scmp.ne.s32.totalorder %s144, %s160
      %p162 = scmp.eq.s32.totalorder %s23, 0
      %p163 = por %p161, %p162
      %p164 = scmp.le.s32.totalorder 1, %s17
      %p165 = scmp.lt.s32.totalorder %s17, 3
      %p166 = pnand %p164, %p165
      %p167 = pneg %p166
      // Predicated region
      $region9: #{tpu_custom_call.1} parent=5 // pred_check
        _
      $region10: #{tpu_custom_call.1} parent=5 // pred_check_branch
        %169 = sbr.rel (%p166) target = $region12
      $region11: #{tpu_custom_call.1} parent=5 // pred_region
        %s170 = ssub.s32 %s17, 1
        // Predicated region
        $region13: #{tpu_custom_call.1} parent=11 // pred_check
          %p171 = pneg %p50
        $region14: #{tpu_custom_call.1} parent=11 // pred_check_branch
          %173 = sbr.rel (%p171) target = $region16
        $region15: #{tpu_custom_call.1} parent=11 // pred_region
          %s175 = ssub.s32 256, 256
          %176 = vsyncadd [#allocation3], %s175
          %s177 = sshll.u32 [#allocation2], 4
          %s178 = int_to_ptr.vmem [resolvable:$true] %s177
          %183 = dma.hbm_to_vmem [thread:$0]  %s0, 256, %s178, [#allocation3], 128, 128, 8
        $region16: #{tpu_custom_call.1} parent=11 // pred_fallthru
          _
      $region12: #{tpu_custom_call.1} parent=5 // pred_fallthru
        _
      %p184 = scmp.lt.s32.totalorder %s17, 2
      // Predicated region
      $region17: #{tpu_custom_call.1} parent=5 // pred_check
        %p185 = pneg %p184
      $region18: #{tpu_custom_call.1} parent=5 // pred_check_branch
        %187 = sbr.rel (%p185) target = $region20
      $region19: #{tpu_custom_call.1} parent=5 // pred_region
        // Predicated region
        $region21: #{tpu_custom_call.1} parent=19 // pred_check
          %p188 = pneg %p72
        $region22: #{tpu_custom_call.1} parent=19 // pred_check_branch
          %190 = sbr.rel (%p188) target = $region24
        $region23: #{tpu_custom_call.1} parent=19 // pred_region
          %s191 = sand.u32 %s62, 1
          %s192 = scalar_lea.sflag [#allocation6], %s191
          %s193 = sand.u32 %s62, 1
          %s194 = smul.addr %s193, 128
          %s195 = scalar_lea.vmem [#allocation5], %s194
          %s196 = smul.u32 16, %s25
          %s198 = ssub.s32 2048, 2048
          %199 = vsyncadd %s192, %s198
          %s200 = smul.addr %s196, 2
          %s201 = sadd.s32 %s24, %s200
          %s202 = smul.addr %s201, 128
          %s203 = scalar_lea.hbm %s1, %s202
          %s204 = sshll.u32 %s195, 4
          %s205 = int_to_ptr.vmem [resolvable:$true] %s204
          %210 = dma.hbm_to_vmem [thread:$0]  %s203, 2048, %s205, %s192, 256, 128, 8
        $region24: #{tpu_custom_call.1} parent=19 // pred_fallthru
          _
        // Predicated region
        $region25: #{tpu_custom_call.1} parent=19 // pred_check
          %p211 = pneg %p98
        $region26: #{tpu_custom_call.1} parent=19 // pred_check_branch
          %213 = sbr.rel (%p211) target = $region28
        $region27: #{tpu_custom_call.1} parent=19 // pred_region
          %p214 = scmp.lt.s32.totalorder %s24, 1
          %s215 = scalar_select %p214, %s24, 1
          %s216 = scalar_lea.vmem %s2, %s215
        $region28: #{tpu_custom_call.1} parent=19 // pred_fallthru
          _
        // Predicated region
        $region29: #{tpu_custom_call.1} parent=19 // pred_check
          %p217 = pneg %p124
        $region30: #{tpu_custom_call.1} parent=19 // pred_check_branch
          %219 = sbr.rel (%p217) target = $region32
        $region31: #{tpu_custom_call.1} parent=19 // pred_region
          %p220 = scmp.lt.s32.totalorder %s24, 1
          %s221 = scalar_select %p220, %s24, 1
          %s222 = scalar_lea.vmem %s3, %s221
        $region32: #{tpu_custom_call.1} parent=19 // pred_fallthru
          _
      $region20: #{tpu_custom_call.1} parent=5 // pred_fallthru
        _
      %p223 = scmp.le.s32.totalorder 1, %s17
      %p224 = scmp.lt.s32.totalorder %s17, 3
      %p225 = pnand %p223, %p224
      %p226 = pneg %p225
      // Predicated region
      $region33: #{tpu_custom_call.1} parent=5 // pred_check
        _
      $region34: #{tpu_custom_call.1} parent=5 // pred_check_branch
        %228 = sbr.rel (%p225) target = $region36
      $region35: #{tpu_custom_call.1} parent=5 // pred_region
        %s229 = ssub.s32 %s17, 1
        // Predicated region
        $region37: #{tpu_custom_call.1} parent=35 // pred_check
          %p230 = pneg %p50
        $region38: #{tpu_custom_call.1} parent=35 // pred_check_branch
          %232 = sbr.rel (%p230) target = $region40
        $region39: #{tpu_custom_call.1} parent=35 // pred_region
          %233 = dma.done [#allocation3], 256
        $region40: #{tpu_custom_call.1} parent=35 // pred_fallthru
          _
        %s234 = sand.u32 %s65, 1
        %s235 = scalar_lea.sflag [#allocation6], %s234
        %s236 = sand.u32 %s65, 1
        %s237 = smul.addr %s236, 128
        %s238 = scalar_lea.vmem [#allocation5], %s237
        // Predicated region
        $region41: #{tpu_custom_call.1} parent=35 // pred_check
          %p239 = pneg %p78
        $region42: #{tpu_custom_call.1} parent=35 // pred_check_branch
          %241 = sbr.rel (%p239) target = $region44
        $region43: #{tpu_custom_call.1} parent=35 // pred_region
          %242 = dma.done %s235, 2048
        $region44: #{tpu_custom_call.1} parent=35 // pred_fallthru
          _
        %p243 = pneg %p50
        %p244 = pneg %p47
        %s245 = sand.u32 %s65, 1
        %s246 = scalar_lea.sflag [#allocation6], %s245
        %s247 = sand.u32 %s65, 1
        %s248 = smul.addr %s247, 128
        %s249 = scalar_lea.vmem [#allocation5], %s248
        %p250 = pneg %p78
        %p251 = pneg %p75
        %p252 = scmp.lt.s32.totalorder %s26, 1
        %s253 = scalar_select %p252, %s26, 1
        %s254 = scalar_lea.vmem %s2, %s253
        %p255 = pneg %p104
        %p256 = pneg %p101
        %p257 = scmp.lt.s32.totalorder %s26, 1
        %s258 = scalar_select %p257, %s26, 1
        %s259 = scalar_lea.vmem %s3, %s258
        %p260 = pneg %p130
        %p261 = pneg %p127
        %p262 = pneg %p156
        %p263 = pneg %p153
        %s264 = sand.u32 %s143, 1
        %s265 = scalar_lea.sflag [#allocation4], %s264
        %s266 = sand.u32 %s143, 1
        %s267 = smul.addr %s266, 16
        %s268 = scalar_lea.vmem [#allocation7], %s267
        %s269 = smul.u32 16, %s27
        %p270 = scmp.lt.s32.totalorder %s26, 1
        %s271 = scalar_select %p270, %s26, 1
        %s272 = scalar_lea.vmem %s2, %s271
        %p273 = scmp.lt.s32.totalorder %s26, 1
        %s274 = scalar_select %p273, %s26, 1
        %s275 = scalar_lea.vmem %s3, %s274
        %p276 = scmp.eq.s32.totalorder %s27, 0
        %v277 = vld [vmem:[#allocation2] sm:$0xff]
        %v278 = vld [vmem:[#allocation2 + $0x8] sm:$0xff]
        %v279 = vld [vmem:[%s238] sm:$0xff]
        %v280 = vld [vmem:[%s238 + $0x8] sm:$0xff]
        %v281 = vld [vmem:[%s238 + $0x10] sm:$0xff]
        %v282 = vld [vmem:[%s238 + $0x18] sm:$0xff]
        %v283 = vld [vmem:[%s238 + $0x20] sm:$0xff]
        %v284 = vld [vmem:[%s238 + $0x28] sm:$0xff]
        %v285 = vld [vmem:[%s238 + $0x30] sm:$0xff]
        %v286 = vld [vmem:[%s238 + $0x38] sm:$0xff]
        %v287 = vld [vmem:[%s238 + $0x40] sm:$0xff]
        %v288 = vld [vmem:[%s238 + $0x48] sm:$0xff]
        %v289 = vld [vmem:[%s238 + $0x50] sm:$0xff]
        %v290 = vld [vmem:[%s238 + $0x58] sm:$0xff]
        %v291 = vld [vmem:[%s238 + $0x60] sm:$0xff]
        %v292 = vld [vmem:[%s238 + $0x68] sm:$0xff]
        %v293 = vld [vmem:[%s238 + $0x70] sm:$0xff]
        %v294 = vld [vmem:[%s238 + $0x78] sm:$0xff]
        %295 = vmatprep.subr.mxu0 0.0
        %296 = vmatpush1.msra.mxu0 %v279
        %297 = vmatprep.subr.mxu0 0.0
        %298 = vmatpush1.msra.mxu0 %v280
        %299 = vmatprep.subr.mxu0 0.0
        %300 = vmatpush1.msra.mxu0 %v281
        %301 = vmatprep.subr.mxu0 0.0
        %302 = vmatpush1.msra.mxu0 %v282
        %303 = vmatprep.subr.mxu0 0.0
        %304 = vmatpush1.msra.mxu0 %v283
        %305 = vmatprep.subr.mxu0 0.0
        %306 = vmatpush1.msra.mxu0 %v284
        %307 = vmatprep.subr.mxu0 0.0
        %308 = vmatpush1.msra.mxu0 %v285
        %309 = vmatprep.subr.mxu0 0.0
        %310 = vmatpush1.msra.mxu0 %v286
        %311 = vmatprep.subr.mxu0 0.0
        %312 = vmatpush1.msra.mxu0 %v287
        %313 = vmatprep.subr.mxu0 0.0
        %314 = vmatpush1.msra.mxu0 %v288
        %315 = vmatprep.subr.mxu0 0.0
        %316 = vmatpush1.msra.mxu0 %v289
        %317 = vmatprep.subr.mxu0 0.0
        %318 = vmatpush1.msra.mxu0 %v290
        %319 = vmatprep.subr.mxu0 0.0
        %320 = vmatpush1.msra.mxu0 %v291
        %321 = vmatprep.subr.mxu0 0.0
        %322 = vmatpush1.msra.mxu0 %v292
        %323 = vmatprep.subr.mxu0 0.0
        %324 = vmatpush1.msra.mxu0 %v293
        %325 = vmatprep.subr.mxu0 0.0
        %326 = vmatpush1.msra.mxu0 %v294
        %327 = vmatprep.subr.mxu0 0.0
        %328 = vmatpush1.msra.mxu0 0.0
        %329 = vmatprep.subr.mxu0 0.0
        %330 = vmatpush1.msra.mxu0 0.0
        %331 = vmatprep.subr.mxu0 0.0
        %332 = vmatpush1.msra.mxu0 0.0
        %333 = vmatprep.subr.mxu0 0.0
        %334 = vmatpush1.msra.mxu0 0.0
        %335 = vmatprep.subr.mxu0 0.0
        %336 = vmatpush1.msra.mxu0 0.0
        %337 = vmatprep.subr.mxu0 0.0
        %338 = vmatpush1.msra.mxu0 0.0
        %339 = vmatprep.subr.mxu0 0.0
        %340 = vmatpush1.msra.mxu0 0.0
        %341 = vmatprep.subr.mxu0 0.0
        %342 = vmatpush1.msra.mxu0 0.0
        %343 = vmatprep.subr.mxu0 0.0
        %344 = vmatpush1.msra.mxu0 0.0
        %345 = vmatprep.subr.mxu0 0.0
        %346 = vmatpush1.msra.mxu0 0.0
        %347 = vmatprep.subr.mxu0 0.0
        %348 = vmatpush1.msra.mxu0 0.0
        %349 = vmatprep.subr.mxu0 0.0
        %350 = vmatpush1.msra.mxu0 0.0
        %351 = vmatprep.subr.mxu0 0.0
        %352 = vmatpush1.msra.mxu0 0.0
        %353 = vmatprep.subr.mxu0 0.0
        %354 = vmatpush1.msra.mxu0 0.0
        %355 = vmatprep.subr.mxu0 0.0
        %356 = vmatpush1.msra.mxu0 0.0
        %357 = vmatprep.subr.mxu0 0.0
        %358 = vmatpush1.msra.mxu0 0.0
        %359 = vmatprep.mubr.f32.mxu0 0.0
        %360 = vmatmul.mubr.f32.gmra.mrb[0].mxu0 %v277
        %v361 = vpop.f32.mrb[0].mxu0
        %v362 = vadd.f32 0.0, %v361
        %v363 = vpop.f32.mrb[0].mxu0
        %364 = vmatprep.mubr.f32.mxu0 0.0
        %365 = vmatmul.mubr.f32.gmra.mrb[0].mxu0 %v278
        %v366 = vpop.f32.mrb[0].mxu0
        %v367 = vadd.f32 0.0, %v366
        %v368 = vpop.f32.mrb[0].mxu0
        %369 = vdwg.mxu0
        // Predicated region
        $region45: #{tpu_custom_call.1} parent=35 // pred_check
          %p370 = pneg %p276
        $region46: #{tpu_custom_call.1} parent=35 // pred_check_branch
          %372 = sbr.rel (%p370) target = $region48
        $region47: #{tpu_custom_call.1} parent=35 // pred_region
          %373 = vst [vmem:[%s268] sm:$0xff] %v362
          %374 = vst [vmem:[%s268 + $0x8] sm:$0xff] %v367
        $region48: #{tpu_custom_call.1} parent=35 // pred_fallthru
          _
        %p375 = scmp.gt.s32.totalorder %s27, 0
        // Predicated region
        $region49: #{tpu_custom_call.1} parent=35 // pred_check
          %p376 = pneg %p375
        $region50: #{tpu_custom_call.1} parent=35 // pred_check_branch
          %378 = sbr.rel (%p376) target = $region52
        $region51: #{tpu_custom_call.1} parent=35 // pred_region
          %v379 = vld [vmem:[%s268] sm:$0xff]
          %v380 = vld [vmem:[%s268 + $0x8] sm:$0xff]
          %v381 = vadd.f32 %v379, %v362
          %v382 = vadd.f32 %v380, %v367
          %383 = vst [vmem:[%s268] sm:$0xff] %v381
          %384 = vst [vmem:[%s268 + $0x8] sm:$0xff] %v382
        $region52: #{tpu_custom_call.1} parent=35 // pred_fallthru
          _
        // Predicated region
        $region53: #{tpu_custom_call.1} parent=35 // pred_check
          %p385 = pneg %p276
        $region54: #{tpu_custom_call.1} parent=35 // pred_check_branch
          %387 = sbr.rel (%p385) target = $region56
        $region55: #{tpu_custom_call.1} parent=35 // pred_region
          %v388 = vld [vmem:[%s268] sm:$0xff]
          %v389 = vld [vmem:[%s268 + $0x8] sm:$0xff]
          %v390 = vadd.f32 %v388, %v389
          %v391 = vrot.slane %v390, 4
          %v392 = vadd.f32 %v390, %v391
          %v393 = vrot.slane %v392, 2
          %v394 = vadd.f32 %v392, %v393
          %v395 = vrot.slane %v394, 1
          %v396 = vadd.f32 %v394, %v395
          %v397 = vmul.f32 %v388, %v388
          %v398 = vmul.f32 %v389, %v389
          %v399 = vadd.f32 %v397, %v398
          %v400 = vrot.slane %v399, 4
          %v401 = vadd.f32 %v399, %v400
          %v402 = vrot.slane %v401, 2
          %v403 = vadd.f32 %v401, %v402
          %v404 = vrot.slane %v403, 1
          %v405 = vadd.f32 %v403, %v404
          %v406 = vmul.f32 %v396, 0.0625
          %v407 = vmul.f32 %v405, 0.0625
          %v408 = vmul.f32 %v406, %v406
          %v409 = vsub.f32 %v407, %v408
          %v410 = vmax.f32 %v409, 0.0
          %v411 = vadd.f32 %v410, 1e-05
          %v412 = vrsqrt.pop %v411
          %v413 = vld [vmem:[%s272] sm:$0x1]
          %v414 = vmul.f32 %v412, %v413
          %v415 = vld [vmem:[%s275] sm:$0x1]
          %v416 = vmul.f32 %v406, %v414
          %v417 = vsub.f32 %v415, %v416
          %v418 = vlaneseq
          %v419 = vshrl.u32 %v418, 7
          %v420 = vsub.s32 0, %v419
          %v421 = vrot.slane %v414, %v420
          %v422 = vmul.f32 %v388, %v421
          %v423 = vmul.f32 %v389, %v421
          %v425 = vlaneseq
          %v426 = vshrl.u32 %v425, 7
          %v427 = vsub.s32 0, %v426
          %v428 = vrot.slane %v417, %v427
          %v430 = vadd.f32 %v422, %v428
          %v431 = vadd.f32 %v423, %v428
          %v432 = vmax.f32 %v430, 0.0
          %v433 = vmax.f32 %v431, 0.0
          %434 = vst [vmem:[%s268] sm:$0xff] %v432
          %435 = vst [vmem:[%s268 + $0x8] sm:$0xff] %v433
        $region56: #{tpu_custom_call.1} parent=35 // pred_fallthru
          _
        %s436 = sand.u32 %s143, 1
        %s437 = scalar_lea.sflag [#allocation4], %s436
        %s438 = sand.u32 %s143, 1
        %s439 = smul.addr %s438, 16
        %s440 = scalar_lea.vmem [#allocation7], %s439
        // Predicated region
        $region57: #{tpu_custom_call.1} parent=35 // pred_check
          %p441 = pneg %p153
        $region58: #{tpu_custom_call.1} parent=35 // pred_check_branch
          %443 = sbr.rel (%p441) target = $region60
        $region59: #{tpu_custom_call.1} parent=35 // pred_region
          %s445 = ssub.s32 256, 256
          %446 = vsyncadd %s437, %s445
          %s447 = smul.addr %s26, 128
          %s448 = scalar_lea.hbm %s4, %s447
          %s449 = sshll.u32 %s440, 4
          %s450 = int_to_ptr.vmem [resolvable:$true] %s449
          %455 = dma.vmem_to_hbm [thread:$0]  %s450, 256, %s448, %s437, 128, 256, 8
        $region60: #{tpu_custom_call.1} parent=35 // pred_fallthru
          _
      $region36: #{tpu_custom_call.1} parent=5 // pred_fallthru
        _
      %p456 = scmp.le.s32.totalorder 2, %s17
      // Predicated region
      $region61: #{tpu_custom_call.1} parent=5 // pred_check
        %p457 = pneg %p456
      $region62: #{tpu_custom_call.1} parent=5 // pred_check_branch
        %459 = sbr.rel (%p457) target = $region64
      $region63: #{tpu_custom_call.1} parent=5 // pred_region
        %s460 = ssub.s32 %s17, 2
        // Predicated region
        $region65: #{tpu_custom_call.1} parent=63 // pred_check
          %p461 = pneg %p159
        $region66: #{tpu_custom_call.1} parent=63 // pred_check_branch
          %463 = sbr.rel (%p461) target = $region68
        $region67: #{tpu_custom_call.1} parent=63 // pred_region
          %s464 = sand.u32 %s144, 1
          %s465 = scalar_lea.sflag [#allocation4], %s464
          %s466 = sand.u32 %s144, 1
          %s467 = smul.addr %s466, 16
          %s468 = scalar_lea.vmem [#allocation7], %s467
          %469 = dma.done %s465, 256
        $region68: #{tpu_custom_call.1} parent=63 // pred_fallthru
          _
      $region64: #{tpu_custom_call.1} parent=5 // pred_fallthru
        _
    $region6: #{tpu_custom_call.1} parent=1 // loop_footer
      %s21 = sadd.s32 1, %s17
    $region7: #{tpu_custom_call.1} parent=1 // loop_footer_branch
      %16 = sbr.rel target = $region3
    $region8: #{tpu_custom_call.1} parent=1 // loop_exit
      _
    %470 = vsyncpa [#allocation3], 1
    %s471 = scalar_lea.sflag [#allocation3], 1
    %472 = vsyncpa %s471, 1
    %473 = vsyncpa [#allocation6], 1
    %s474 = scalar_lea.sflag [#allocation6], 1
    %475 = vsyncpa %s474, 1
    %476 = vsyncpa [#allocation4], 1
    %s477 = scalar_lea.sflag [#allocation4], 1
    %478 = vsyncpa %s477, 1

</llo_original>
